<compile_context>
chip_gen: v7x
topology: tpu7x:2x2x1
jax: 0.10.0
libtpu: 0.0.40
codegen_flags: <defaults>
</compile_context>

<pallas_src>
import functools

import jax
import jax.numpy as jnp
from jax.experimental import pallas as pl
from jax.experimental.pallas import tpu as pltpu


def _mlp_kernel(x_ref, w_ref, b_ref, o_ref, *, dims):
    """Fused MLP: x -> [Linear + sigmoid] * (L-1) -> Linear, in one body.

    x_ref: [TB, Din] f32 activation tile
    w_ref: [L, max_in, max_out] f32 stacked (zero-padded) weights, [in, out]
    b_ref: [L, 1, max_out] f32 stacked (zero-padded) biases
    o_ref: [TB, Dout] f32 output tile
    """
    num_layers = len(dims) - 1
    x = x_ref[...]
    for i in range(num_layers):
        in_i, out_i = dims[i], dims[i + 1]
        # Static leading-axis index + origin slices: no lane realignment.
        w = w_ref[i][:in_i, :out_i]
        b = b_ref[i][:, :out_i]
        y = jnp.dot(x, w, preferred_element_type=jnp.float32) + b
        if i != num_layers - 1:
            # sigmoid(z) = 1 / (1 + exp(-z)); exp + reciprocal live on the EUP
            # slot (idle otherwise).  approx=False keeps full f32 accuracy.
            y = pl.reciprocal(1.0 + jnp.exp(-y), approx=False)
        x = y
    o_ref[...] = x.astype(o_ref.dtype)


def pack_params(params):
    """Pack per-layer (W_t, b) into stacked VMEM-friendly arrays.

    Called ONCE (outside the forward path).  Returns:
      w_stack: [L, max_in, max_out] f32 (zero-padded to the max layer dims)
      b_stack: [L, 1, max_out]      f32 (zero-padded)
      dims:    (Din, D1, ..., Dout) true layer widths
    """
    num_layers = len(params)
    ins = [w.shape[0] for (w, _) in params]
    outs = [w.shape[1] for (w, _) in params]
    max_in, max_out = max(ins), max(outs)

    w_stack = jnp.zeros((num_layers, max_in, max_out), jnp.float32)
    b_stack = jnp.zeros((num_layers, 1, max_out), jnp.float32)
    for i, (w, b) in enumerate(params):
        w_stack = w_stack.at[i, :ins[i], :outs[i]].set(w)
        b_stack = b_stack.at[i, 0, :outs[i]].set(b.reshape(-1))
    dims = tuple([ins[0]] + outs)
    return w_stack, b_stack, dims


def net_forward(x, w_stack, b_stack, dims, *, batch_tile=512):
    """Forward pass of Net: sigmoid after every layer except the last.

    x:        [B, Din] f32
    w_stack:  [L, max_in, max_out] f32 (from pack_params)
    b_stack:  [L, 1, max_out] f32      (from pack_params)
    dims:     true layer widths (Din, D1, ..., Dout)
    """
    B, din = x.shape
    assert din == dims[0]
    dout = dims[-1]
    num_layers = len(dims) - 1

    # Batch tiling: single full-array block for small B; otherwise 8-aligned
    # tiles so the grid pipelines x/out and shards across TCs on v7x.
    if B <= batch_tile:
        tb = B
    else:
        tb = max((batch_tile // 8) * 8, 8)
    grid = (pl.cdiv(B, tb),)

    flops = 2 * B * sum(dims[i] * dims[i + 1] for i in range(num_layers))
    transcendentals = B * sum(dims[1:-1])  # one exp per hidden activation
    bytes_accessed = 4 * (x.size + w_stack.size + b_stack.size + B * dout)

    kernel = functools.partial(_mlp_kernel, dims=dims)

    return pl.pallas_call(
        kernel,
        out_shape=jax.ShapeDtypeStruct((B, dout), jnp.float32),
        grid=grid,
        in_specs=[
            pl.BlockSpec((tb, din), lambda i: (i, 0)),
            # Constant index_map: weights/biases fetched once, resident
            # across all batch-grid steps.
            pl.BlockSpec(w_stack.shape, lambda i: (0, 0, 0)),
            pl.BlockSpec(b_stack.shape, lambda i: (0, 0, 0)),
        ],
        out_specs=pl.BlockSpec((tb, dout), lambda i: (i, 0)),
        compiler_params=pltpu.CompilerParams(
            dimension_semantics=("parallel",),
            vmem_limit_bytes=32 * 1024 * 1024,
        ),
        cost_estimate=pl.CostEstimate(
            flops=flops,
            transcendentals=transcendentals,
            bytes_accessed=bytes_accessed,
        ),
    )(x, w_stack, b_stack)


def init_params(key, nn_arch):
    """Deterministic parameter init mirroring nn.Linear shapes.

    Returns list of (W_t, b) with W_t: [in, out], b: [1, out].
    """
    params = []
    for i in range(len(nn_arch) - 1):
        fan_in, fan_out = nn_arch[i], nn_arch[i + 1]
        key, kw, kb = jax.random.split(key, 3)
        bound = 1.0 / (fan_in ** 0.5)  # PyTorch default uniform bound
        w = jax.random.uniform(kw, (fan_out, fan_in), jnp.float32, -bound, bound)
        b = jax.random.uniform(kb, (fan_out,), jnp.float32, -bound, bound)
        params.append((w.T, b.reshape(1, fan_out)))
    return params


if __name__ == "__main__":
    # Small shapes consistent with the module: an MLP arch and a batch of rows.
    nn_arch = [16, 32, 32, 8]
    batch = 4

    key = jax.random.PRNGKey(0)
    key, kx = jax.random.split(key)
    x = jax.random.normal(kx, (batch, nn_arch[0]), dtype=jnp.float32)

    params = init_params(key, nn_arch)

    # Pack parameters ONCE (outside the per-call path).
    w_stack, b_stack, dims = pack_params(params)
    w_stack = jax.block_until_ready(w_stack)
    b_stack = jax.block_until_ready(b_stack)

    out = net_forward(x, w_stack, b_stack, dims)
    out = jax.block_until_ready(out)

    # Pure-JAX reference of the same math (on the original unpacked params).
    ref = x
    for i, (w_t, b) in enumerate(params):
        ref = ref @ w_t + b
        if i != len(params) - 1:
            ref = jax.nn.sigmoid(ref)

    assert out.shape == (batch, nn_arch[-1])
    assert jnp.allclose(out, ref, atol=1e-4, rtol=1e-4)

    print("KERNEL_OK")
</pallas_src>

<mosaic_0001>
module attributes {stable_mosaic.version = 11 : i64} {
  func.func @_mlp_kernel(%arg0: i32, %arg1: memref<4x16xf32, #tpu.memory_space<vmem>>, %arg2: memref<3x32x32xf32, #tpu.memory_space<vmem>>, %arg3: memref<3x1x32xf32, #tpu.memory_space<vmem>>, %arg4: memref<4x8xf32, #tpu.memory_space<vmem>>) attributes {dimension_semantics = [#tpu.dimension_semantics<parallel>], iteration_bounds = array<i64: 1>, scalar_prefetch = 0 : i64, scratch_operands = 0 : i64, tpu.core_type = #tpu.core_type<tc>, window_params = [{transform_indices = @transform_0, window_bounds = array<i64: 4, 16>}, {pipeline_mode = #tpu.pipeline_mode<synchronous>, transform_indices = @transform_1, window_bounds = array<i64: 3, 32, 32>}, {pipeline_mode = #tpu.pipeline_mode<synchronous>, transform_indices = @transform_2, window_bounds = array<i64: 3, 1, 32>}, {transform_indices = @transform_3, window_bounds = array<i64: 4, 8>}]} {
    %c0 = arith.constant 0 : index
    %c0_0 = arith.constant 0 : index
    %0 = vector.load %arg1[%c0, %c0_0] : memref<4x16xf32, #tpu.memory_space<vmem>>, vector<4x16xf32>
    %c0_1 = arith.constant 0 : index
    %c0_2 = arith.constant 0 : index
    %c0_3 = arith.constant 0 : index
    %1 = vector.load %arg2[%c0_1, %c0_2, %c0_3] : memref<3x32x32xf32, #tpu.memory_space<vmem>>, vector<1x32x32xf32>
    %2 = vector.shape_cast %1 : vector<1x32x32xf32> to vector<32x32xf32>
    %3 = vector.extract_strided_slice %2 {offsets = [0, 0], sizes = [16, 32], strides = [1, 1]} : vector<32x32xf32> to vector<16x32xf32>
    %c0_4 = arith.constant 0 : index
    %c0_5 = arith.constant 0 : index
    %c0_6 = arith.constant 0 : index
    %4 = vector.load %arg3[%c0_4, %c0_5, %c0_6] : memref<3x1x32xf32, #tpu.memory_space<vmem>>, vector<1x1x32xf32>
    %5 = vector.shape_cast %4 : vector<1x1x32xf32> to vector<1x32xf32>
    %cst = arith.constant dense<0.000000e+00> : vector<4x32xf32>
    %6 = tpu.matmul %0, %3, %cst {dimension_numbers = #tpu.dot_dimension_numbers<[1], [0], [0], [1], [0, 0, 1, 1], [], []>} : vector<4x16xf32>, vector<16x32xf32>, vector<4x32xf32> -> vector<4x32xf32>
    %7 = vector.broadcast %5 : vector<1x32xf32> to vector<4x32xf32>
    %8 = arith.addf %6, %7 : vector<4x32xf32>
    %cst_7 = arith.constant 0.000000e+00 : f32
    %9 = vector.broadcast %cst_7 : f32 to vector<4x32xf32>
    %10 = arith.subf %9, %8 : vector<4x32xf32>
    %11 = math.exp %10 : vector<4x32xf32>
    %cst_8 = arith.constant 1.000000e+00 : f32
    %12 = vector.broadcast %cst_8 : f32 to vector<4x32xf32>
    %13 = arith.addf %12, %11 : vector<4x32xf32>
    %14 = tpu.reciprocal %13 : vector<4x32xf32> -> vector<4x32xf32>
    %c1 = arith.constant 1 : index
    %c0_9 = arith.constant 0 : index
    %c0_10 = arith.constant 0 : index
    %15 = vector.load %arg2[%c1, %c0_9, %c0_10] : memref<3x32x32xf32, #tpu.memory_space<vmem>>, vector<1x32x32xf32>
    %16 = vector.shape_cast %15 : vector<1x32x32xf32> to vector<32x32xf32>
    %c1_11 = arith.constant 1 : index
    %c0_12 = arith.constant 0 : index
    %c0_13 = arith.constant 0 : index
    %17 = vector.load %arg3[%c1_11, %c0_12, %c0_13] : memref<3x1x32xf32, #tpu.memory_space<vmem>>, vector<1x1x32xf32>
    %18 = vector.shape_cast %17 : vector<1x1x32xf32> to vector<1x32xf32>
    %cst_14 = arith.constant dense<0.000000e+00> : vector<4x32xf32>
    %19 = tpu.matmul %14, %16, %cst_14 {dimension_numbers = #tpu.dot_dimension_numbers<[1], [0], [0], [1], [0, 0, 1, 1], [], []>} : vector<4x32xf32>, vector<32x32xf32>, vector<4x32xf32> -> vector<4x32xf32>
    %20 = vector.broadcast %18 : vector<1x32xf32> to vector<4x32xf32>
    %21 = arith.addf %19, %20 : vector<4x32xf32>
    %cst_15 = arith.constant 0.000000e+00 : f32
    %22 = vector.broadcast %cst_15 : f32 to vector<4x32xf32>
    %23 = arith.subf %22, %21 : vector<4x32xf32>
    %24 = math.exp %23 : vector<4x32xf32>
    %cst_16 = arith.constant 1.000000e+00 : f32
    %25 = vector.broadcast %cst_16 : f32 to vector<4x32xf32>
    %26 = arith.addf %25, %24 : vector<4x32xf32>
    %27 = tpu.reciprocal %26 : vector<4x32xf32> -> vector<4x32xf32>
    %c2 = arith.constant 2 : index
    %c0_17 = arith.constant 0 : index
    %c0_18 = arith.constant 0 : index
    %28 = vector.load %arg2[%c2, %c0_17, %c0_18] : memref<3x32x32xf32, #tpu.memory_space<vmem>>, vector<1x32x32xf32>
    %29 = vector.shape_cast %28 : vector<1x32x32xf32> to vector<32x32xf32>
    %30 = vector.extract_strided_slice %29 {offsets = [0, 0], sizes = [32, 8], strides = [1, 1]} : vector<32x32xf32> to vector<32x8xf32>
    %c2_19 = arith.constant 2 : index
    %c0_20 = arith.constant 0 : index
    %c0_21 = arith.constant 0 : index
    %31 = vector.load %arg3[%c2_19, %c0_20, %c0_21] : memref<3x1x32xf32, #tpu.memory_space<vmem>>, vector<1x1x32xf32>
    %32 = vector.shape_cast %31 : vector<1x1x32xf32> to vector<1x32xf32>
    %33 = vector.extract_strided_slice %32 {offsets = [0, 0], sizes = [1, 8], strides = [1, 1]} : vector<1x32xf32> to vector<1x8xf32>
    %cst_22 = arith.constant dense<0.000000e+00> : vector<4x8xf32>
    %34 = tpu.matmul %27, %30, %cst_22 {dimension_numbers = #tpu.dot_dimension_numbers<[1], [0], [0], [1], [0, 0, 1, 1], [], []>} : vector<4x32xf32>, vector<32x8xf32>, vector<4x8xf32> -> vector<4x8xf32>
    %35 = vector.broadcast %33 : vector<1x8xf32> to vector<4x8xf32>
    %36 = arith.addf %34, %35 : vector<4x8xf32>
    %c0_23 = arith.constant 0 : index
    %c0_24 = arith.constant 0 : index
    %37 = vector.load %arg4[%c0_23, %c0_24] : memref<4x8xf32, #tpu.memory_space<vmem>>, vector<4x8xf32>
    tpu.vector_store %arg4[%c0_23, %c0_24], %36 {strides = array<i32>} : memref<4x8xf32, #tpu.memory_space<vmem>>, vector<4x8xf32>,
    return
  }
  func.func @transform_0(%arg0: i32) -> (i32, i32) {
    %c0_i32 = arith.constant 0 : i32
    %c0_i32_0 = arith.constant 0 : i32
    return %arg0, %c0_i32 : i32, i32
  }
  func.func @transform_1(%arg0: i32) -> (i32, i32, i32) {
    %c0_i32 = arith.constant 0 : i32
    %c0_i32_0 = arith.constant 0 : i32
    %c0_i32_1 = arith.constant 0 : i32
    %c0_i32_2 = arith.constant 0 : i32
    return %c0_i32, %c0_i32_0, %c0_i32_1 : i32, i32, i32
  }
  func.func @transform_2(%arg0: i32) -> (i32, i32, i32) {
    %c0_i32 = arith.constant 0 : i32
    %c0_i32_0 = arith.constant 0 : i32
    %c0_i32_1 = arith.constant 0 : i32
    %c0_i32_2 = arith.constant 0 : i32
    return %c0_i32, %c0_i32_0, %c0_i32_1 : i32, i32, i32
  }
  func.func @transform_3(%arg0: i32) -> (i32, i32) {
    %c0_i32 = arith.constant 0 : i32
    %c0_i32_0 = arith.constant 0 : i32
    return %arg0, %c0_i32 : i32, i32
  }
}

</mosaic_0001>

<llo_original>
// kernel: tpu_custom_call.1
$region0: #{tpu_custom_call.1}
  #allocation0 [shape = 'u32[]', space=smem, size = 0x4, offset = 0x4, fixed_abs, tag = 'smem constant byte address 0x4 - core index']
  #allocation1 [shape = 'u32[144,128]{1,0:T(1,128)}', space=vmem, size = 0x12000, scoped, tag = 'internal scratch']
  %s0 = inlined_call_operand.hbm [shape: f32[4,16], index: 0, kind: input, shape index: {}]
  %s1 = inlined_call_operand.hbm [shape: f32[3,32,32], index: 1, kind: input, shape index: {}]
  %s2 = inlined_call_operand.vmem [shape: f32[3,1,32], index: 2, kind: input, shape index: {}]
  %s3 = inlined_call_operand.hbm [shape: f32[4,8], index: 3, kind: output, shape index: {}]
  %s4 = sld [smem:[#allocation0]]
  $region30: #{tpu_custom_call.1} parent=0
    _
  %s6 = ssub.s32 1, %s4
  %s7 = scalar_select 0, %s6, %s4
  $region1: #{tpu_custom_call.1} parent=0
    #allocation2 [shape = 'u8[2048]{0}', space=vmem, size = 0x800, scoped, tag = 'input window, operand 0, single buffered']
    #allocation3 [shape = 's32[1]{0}', space=sflag, size = 0x4, scoped, tag = 'scoped memory for tpu_custom_call.1']
    #allocation4 [shape = 's32[1]{0}', space=sflag, size = 0x4, scoped, tag = 'scoped memory for tpu_custom_call.1']
    #allocation5 [shape = 'u8[49152]{0}', space=vmem, size = 0xc000, scoped, tag = 'input window, operand 1, single buffered']
    #allocation6 [shape = 's32[1]{0}', space=sflag, size = 0x4, scoped, tag = 'scoped memory for tpu_custom_call.1']
    #allocation7 [shape = 'u8[2048]{0}', space=vmem, size = 0x800, scoped, tag = 'output window, operand 0, single buffered']
    %8 = vsyncpa [#allocation3], 0
    %9 = vsyncpa [#allocation6], 0
    %10 = vsyncpa [#allocation4], 0
    // Predicated region
    $region2: #{tpu_custom_call.1} parent=1 // pred_check
      _
    $region3: #{tpu_custom_call.1} parent=1 // pred_check_branch
      %12 = sbr.rel (0) target = $region5
    $region4: #{tpu_custom_call.1} parent=1 // pred_region
      %s14 = ssub.s32 64, 64
      %15 = vsyncadd [#allocation3], %s14
      %s17 = sshll.u32 [#allocation2], 4
      %s18 = int_to_ptr.vmem [resolvable:$true] %s17
      %20 = dma.hbm_to_vmem [thread:$0]  %s0, 64, %s18, [#allocation3]
    $region5: #{tpu_custom_call.1} parent=1 // pred_fallthru
      _
    // Predicated region
    $region6: #{tpu_custom_call.1} parent=1 // pred_check
      _
    $region7: #{tpu_custom_call.1} parent=1 // pred_check_branch
      %22 = sbr.rel (0) target = $region9
    $region8: #{tpu_custom_call.1} parent=1 // pred_region
      %s24 = ssub.s32 1536, 1536
      %25 = vsyncadd [#allocation6], %s24
      %s26 = sshll.u32 [#allocation5], 4
      %s27 = int_to_ptr.vmem [resolvable:$true] %s26
      %32 = dma.hbm_to_vmem [thread:$0]  %s1, 1536, %s27, [#allocation6], 128, 128, 8
    $region9: #{tpu_custom_call.1} parent=1 // pred_fallthru
      _
    // Predicated region
    $region10: #{tpu_custom_call.1} parent=1 // pred_check
      _
    $region11: #{tpu_custom_call.1} parent=1 // pred_check_branch
      %34 = sbr.rel (0) target = $region13
    $region12: #{tpu_custom_call.1} parent=1 // pred_region
      _
    $region13: #{tpu_custom_call.1} parent=1 // pred_fallthru
      _
    // Predicated region
    $region14: #{tpu_custom_call.1} parent=1 // pred_check
      _
    $region15: #{tpu_custom_call.1} parent=1 // pred_check_branch
      %36 = sbr.rel (0) target = $region17
    $region16: #{tpu_custom_call.1} parent=1 // pred_region
      %37 = dma.done [#allocation3], 64
    $region17: #{tpu_custom_call.1} parent=1 // pred_fallthru
      _
    // Predicated region
    $region18: #{tpu_custom_call.1} parent=1 // pred_check
      _
    $region19: #{tpu_custom_call.1} parent=1 // pred_check_branch
      %39 = sbr.rel (0) target = $region21
    $region20: #{tpu_custom_call.1} parent=1 // pred_region
      %40 = dma.done [#allocation6], 1536
    $region21: #{tpu_custom_call.1} parent=1 // pred_fallthru
      _
    %v41 = vld [vmem:[#allocation2] sm:$0xf]
    %v42 = vld [vmem:[#allocation5] sm:$0xff]
    %v43 = vld [vmem:[#allocation5 + $0x8] sm:$0xff]
    %v44 = vld [vmem:[%s2] sm:$0x1]
    %v46 = vlaneseq
    %v47 = vshrl.u32 %v46, 7
    %v48 = vsub.s32 0, %v47
    %v49 = vrot.slane %v44, %v48
    %vm51 = vcmask 130048
    %v53 = vsel %vm51, %v41, 0
    %55 = vmatprep.subr.mxu0 0.0
    %56 = vmatpush1.msra.mxu0 %v42
    %57 = vmatprep.subr.mxu0 0.0
    %58 = vmatpush1.msra.mxu0 %v43
    %59 = vmatprep.subr.mxu0 0.0
    %60 = vmatpush1.msra.mxu0 0.0
    %61 = vmatprep.subr.mxu0 0.0
    %62 = vmatpush1.msra.mxu0 0.0
    %63 = vmatprep.subr.mxu0 0.0
    %64 = vmatpush1.msra.mxu0 0.0
    %65 = vmatprep.subr.mxu0 0.0
    %66 = vmatpush1.msra.mxu0 0.0
    %67 = vmatprep.subr.mxu0 0.0
    %68 = vmatpush1.msra.mxu0 0.0
    %69 = vmatprep.subr.mxu0 0.0
    %70 = vmatpush1.msra.mxu0 0.0
    %71 = vmatprep.subr.mxu0 0.0
    %72 = vmatpush1.msra.mxu0 0.0
    %73 = vmatprep.subr.mxu0 0.0
    %74 = vmatpush1.msra.mxu0 0.0
    %75 = vmatprep.subr.mxu0 0.0
    %76 = vmatpush1.msra.mxu0 0.0
    %77 = vmatprep.subr.mxu0 0.0
    %78 = vmatpush1.msra.mxu0 0.0
    %79 = vmatprep.subr.mxu0 0.0
    %80 = vmatpush1.msra.mxu0 0.0
    %81 = vmatprep.subr.mxu0 0.0
    %82 = vmatpush1.msra.mxu0 0.0
    %83 = vmatprep.subr.mxu0 0.0
    %84 = vmatpush1.msra.mxu0 0.0
    %85 = vmatprep.subr.mxu0 0.0
    %86 = vmatpush1.msra.mxu0 0.0
    %87 = vmatprep.subr.mxu0 0.0
    %88 = vmatpush1.msra.mxu0 0.0
    %89 = vmatprep.subr.mxu0 0.0
    %90 = vmatpush1.msra.mxu0 0.0
    %91 = vmatprep.subr.mxu0 0.0
    %92 = vmatpush1.msra.mxu0 0.0
    %93 = vmatprep.subr.mxu0 0.0
    %94 = vmatpush1.msra.mxu0 0.0
    %95 = vmatprep.subr.mxu0 0.0
    %96 = vmatpush1.msra.mxu0 0.0
    %97 = vmatprep.subr.mxu0 0.0
    %98 = vmatpush1.msra.mxu0 0.0
    %99 = vmatprep.subr.mxu0 0.0
    %100 = vmatpush1.msra.mxu0 0.0
    %101 = vmatprep.subr.mxu0 0.0
    %102 = vmatpush1.msra.mxu0 0.0
    %103 = vmatprep.subr.mxu0 0.0
    %104 = vmatpush1.msra.mxu0 0.0
    %105 = vmatprep.subr.mxu0 0.0
    %106 = vmatpush1.msra.mxu0 0.0
    %107 = vmatprep.subr.mxu0 0.0
    %108 = vmatpush1.msra.mxu0 0.0
    %109 = vmatprep.subr.mxu0 0.0
    %110 = vmatpush1.msra.mxu0 0.0
    %111 = vmatprep.subr.mxu0 0.0
    %112 = vmatpush1.msra.mxu0 0.0
    %113 = vmatprep.subr.mxu0 0.0
    %114 = vmatpush1.msra.mxu0 0.0
    %115 = vmatprep.subr.mxu0 0.0
    %116 = vmatpush1.msra.mxu0 0.0
    %117 = vmatprep.subr.mxu0 0.0
    %118 = vmatpush1.msra.mxu0 0.0
    %119 = vmatprep.mubr.f32.mxu0 0.0
    %120 = vmatmul.mubr.f32.gmra.mrb[0].mxu0 %v53
    %v121 = vpop.f32.mrb[0].mxu0
    %v122 = vadd.f32 %v49, %v121
    %v123 = vpop.f32.mrb[0].mxu0
    %124 = vdwg.mxu0
    %v125 = vsub.f32 0.0, %v122
    %v126 = vmul.f32 %v125, 1.442695
    %v127 = vpow.pop %v126
    %v128 = vadd.f32 %v127, 1.0
    %v129 = vrcp.pop %v128
    %s130 = scalar_lea.vmem [#allocation5], 32
    %v131 = vld [vmem:[%s130] sm:$0xff]
    %v132 = vld [vmem:[%s130 + $0x8] sm:$0xff]
    %v133 = vld [vmem:[%s130 + $0x10] sm:$0xff]
    %v134 = vld [vmem:[%s130 + $0x18] sm:$0xff]
    %s135 = scalar_lea.vmem %s2, 1
    %v136 = vld [vmem:[%s135] sm:$0x1]
    %v138 = vlaneseq
    %v139 = vshrl.u32 %v138, 7
    %v140 = vsub.s32 0, %v139
    %v141 = vrot.slane %v136, %v140
    %vm143 = vcmask 261120
    %v145 = vsel %vm143, %v129, 0
    %147 = vmatprep.subr.mxu0 0.0
    %148 = vmatpush1.msra.mxu0 %v131
    %149 = vmatprep.subr.mxu0 0.0
    %150 = vmatpush1.msra.mxu0 %v132
    %151 = vmatprep.subr.mxu0 0.0
    %152 = vmatpush1.msra.mxu0 %v133
    %153 = vmatprep.subr.mxu0 0.0
    %154 = vmatpush1.msra.mxu0 %v134
    %155 = vmatprep.subr.mxu0 0.0
    %156 = vmatpush1.msra.mxu0 0.0
    %157 = vmatprep.subr.mxu0 0.0
    %158 = vmatpush1.msra.mxu0 0.0
    %159 = vmatprep.subr.mxu0 0.0
    %160 = vmatpush1.msra.mxu0 0.0
    %161 = vmatprep.subr.mxu0 0.0
    %162 = vmatpush1.msra.mxu0 0.0
    %163 = vmatprep.subr.mxu0 0.0
    %164 = vmatpush1.msra.mxu0 0.0
    %165 = vmatprep.subr.mxu0 0.0
    %166 = vmatpush1.msra.mxu0 0.0
    %167 = vmatprep.subr.mxu0 0.0
    %168 = vmatpush1.msra.mxu0 0.0
    %169 = vmatprep.subr.mxu0 0.0
    %170 = vmatpush1.msra.mxu0 0.0
    %171 = vmatprep.subr.mxu0 0.0
    %172 = vmatpush1.msra.mxu0 0.0
    %173 = vmatprep.subr.mxu0 0.0
    %174 = vmatpush1.msra.mxu0 0.0
    %175 = vmatprep.subr.mxu0 0.0
    %176 = vmatpush1.msra.mxu0 0.0
    %177 = vmatprep.subr.mxu0 0.0
    %178 = vmatpush1.msra.mxu0 0.0
    %179 = vmatprep.subr.mxu0 0.0
    %180 = vmatpush1.msra.mxu0 0.0
    %181 = vmatprep.subr.mxu0 0.0
    %182 = vmatpush1.msra.mxu0 0.0
    %183 = vmatprep.subr.mxu0 0.0
    %184 = vmatpush1.msra.mxu0 0.0
    %185 = vmatprep.subr.mxu0 0.0
    %186 = vmatpush1.msra.mxu0 0.0
    %187 = vmatprep.subr.mxu0 0.0
    %188 = vmatpush1.msra.mxu0 0.0
    %189 = vmatprep.subr.mxu0 0.0
    %190 = vmatpush1.msra.mxu0 0.0
    %191 = vmatprep.subr.mxu0 0.0
    %192 = vmatpush1.msra.mxu0 0.0
    %193 = vmatprep.subr.mxu0 0.0
    %194 = vmatpush1.msra.mxu0 0.0
    %195 = vmatprep.subr.mxu0 0.0
    %196 = vmatpush1.msra.mxu0 0.0
    %197 = vmatprep.subr.mxu0 0.0
    %198 = vmatpush1.msra.mxu0 0.0
    %199 = vmatprep.subr.mxu0 0.0
    %200 = vmatpush1.msra.mxu0 0.0
    %201 = vmatprep.subr.mxu0 0.0
    %202 = vmatpush1.msra.mxu0 0.0
    %203 = vmatprep.subr.mxu0 0.0
    %204 = vmatpush1.msra.mxu0 0.0
    %205 = vmatprep.subr.mxu0 0.0
    %206 = vmatpush1.msra.mxu0 0.0
    %207 = vmatprep.subr.mxu0 0.0
    %208 = vmatpush1.msra.mxu0 0.0
    %209 = vmatprep.subr.mxu0 0.0
    %210 = vmatpush1.msra.mxu0 0.0
    %211 = vmatprep.mubr.f32.mxu0 0.0
    %212 = vmatmul.mubr.f32.gmra.mrb[0].mxu0 %v145
    %v213 = vpop.f32.mrb[0].mxu0
    %v214 = vadd.f32 %v141, %v213
    %v215 = vpop.f32.mrb[0].mxu0
    %216 = vdwg.mxu0
    %v217 = vsub.f32 0.0, %v214
    %v218 = vmul.f32 %v217, 1.442695
    %v219 = vpow.pop %v218
    %v220 = vadd.f32 %v219, 1.0
    %v221 = vrcp.pop %v220
    %s222 = scalar_lea.vmem [#allocation5], 64
    %v223 = vld [vmem:[%s222] sm:$0xff]
    %v224 = vld [vmem:[%s222 + $0x8] sm:$0xff]
    %v225 = vld [vmem:[%s222 + $0x10] sm:$0xff]
    %v226 = vld [vmem:[%s222 + $0x18] sm:$0xff]
    %s227 = scalar_lea.vmem %s2, 2
    %v228 = vld [vmem:[%s227] sm:$0x1]
    %v230 = vlaneseq
    %v231 = vshrl.u32 %v230, 7
    %v232 = vsub.s32 0, %v231
    %v233 = vrot.slane %v228, %v232
    %v236 = vsel %vm143, %v221, 0
    %238 = vmatprep.subr.mxu0 0.0
    %239 = vmatpush1.msra.mxu0 %v223
    %240 = vmatprep.subr.mxu0 0.0
    %241 = vmatpush1.msra.mxu0 %v224
    %242 = vmatprep.subr.mxu0 0.0
    %243 = vmatpush1.msra.mxu0 %v225
    %244 = vmatprep.subr.mxu0 0.0
    %245 = vmatpush1.msra.mxu0 %v226
    %246 = vmatprep.subr.mxu0 0.0
    %247 = vmatpush1.msra.mxu0 0.0
    %248 = vmatprep.subr.mxu0 0.0
    %249 = vmatpush1.msra.mxu0 0.0
    %250 = vmatprep.subr.mxu0 0.0
    %251 = vmatpush1.msra.mxu0 0.0
    %252 = vmatprep.subr.mxu0 0.0
    %253 = vmatpush1.msra.mxu0 0.0
    %254 = vmatprep.subr.mxu0 0.0
    %255 = vmatpush1.msra.mxu0 0.0
    %256 = vmatprep.subr.mxu0 0.0
    %257 = vmatpush1.msra.mxu0 0.0
    %258 = vmatprep.subr.mxu0 0.0
    %259 = vmatpush1.msra.mxu0 0.0
    %260 = vmatprep.subr.mxu0 0.0
    %261 = vmatpush1.msra.mxu0 0.0
    %262 = vmatprep.subr.mxu0 0.0
    %263 = vmatpush1.msra.mxu0 0.0
    %264 = vmatprep.subr.mxu0 0.0
    %265 = vmatpush1.msra.mxu0 0.0
    %266 = vmatprep.subr.mxu0 0.0
    %267 = vmatpush1.msra.mxu0 0.0
    %268 = vmatprep.subr.mxu0 0.0
    %269 = vmatpush1.msra.mxu0 0.0
    %270 = vmatprep.subr.mxu0 0.0
    %271 = vmatpush1.msra.mxu0 0.0
    %272 = vmatprep.subr.mxu0 0.0
    %273 = vmatpush1.msra.mxu0 0.0
    %274 = vmatprep.subr.mxu0 0.0
    %275 = vmatpush1.msra.mxu0 0.0
    %276 = vmatprep.subr.mxu0 0.0
    %277 = vmatpush1.msra.mxu0 0.0
    %278 = vmatprep.subr.mxu0 0.0
    %279 = vmatpush1.msra.mxu0 0.0
    %280 = vmatprep.subr.mxu0 0.0
    %281 = vmatpush1.msra.mxu0 0.0
    %282 = vmatprep.subr.mxu0 0.0
    %283 = vmatpush1.msra.mxu0 0.0
    %284 = vmatprep.subr.mxu0 0.0
    %285 = vmatpush1.msra.mxu0 0.0
    %286 = vmatprep.subr.mxu0 0.0
    %287 = vmatpush1.msra.mxu0 0.0
    %288 = vmatprep.subr.mxu0 0.0
    %289 = vmatpush1.msra.mxu0 0.0
    %290 = vmatprep.subr.mxu0 0.0
    %291 = vmatpush1.msra.mxu0 0.0
    %292 = vmatprep.subr.mxu0 0.0
    %293 = vmatpush1.msra.mxu0 0.0
    %294 = vmatprep.subr.mxu0 0.0
    %295 = vmatpush1.msra.mxu0 0.0
    %296 = vmatprep.subr.mxu0 0.0
    %297 = vmatpush1.msra.mxu0 0.0
    %298 = vmatprep.subr.mxu0 0.0
    %299 = vmatpush1.msra.mxu0 0.0
    %300 = vmatprep.subr.mxu0 0.0
    %301 = vmatpush1.msra.mxu0 0.0
    %302 = vmatprep.mubr.f32.mxu0 0.0
    %303 = vmatmul.mubr.f32.gmra.mrb[0].mxu0 %v236
    %v304 = vpop.f32.mrb[0].mxu0
    %v305 = vadd.f32 %v233, %v304
    %v306 = vpop.f32.mrb[0].mxu0
    %307 = vdwg.mxu0
    %vm308 = vcmask 60416
    %309 = vst.msk [vmem:[#allocation7] sm:$0xf] %vm308, %v305
    // Predicated region
    $region22: #{tpu_custom_call.1} parent=1 // pred_check
      _
    $region23: #{tpu_custom_call.1} parent=1 // pred_check_branch
      %311 = sbr.rel (0) target = $region25
    $region24: #{tpu_custom_call.1} parent=1 // pred_region
      %s313 = ssub.s32 64, 64
      %314 = vsyncadd [#allocation4], %s313
      %s316 = sshll.u32 [#allocation7], 4
      %s317 = int_to_ptr.vmem [resolvable:$true] %s316
      %319 = dma.vmem_to_hbm [thread:$0]  %s317, 64, %s3, [#allocation4]
    $region25: #{tpu_custom_call.1} parent=1 // pred_fallthru
      _
    // Predicated region
    $region26: #{tpu_custom_call.1} parent=1 // pred_check
      _
    $region27: #{tpu_custom_call.1} parent=1 // pred_check_branch
      %321 = sbr.rel (0) target = $region29
    $region28: #{tpu_custom_call.1} parent=1 // pred_region
      %322 = dma.done [#allocation4], 64
    $region29: #{tpu_custom_call.1} parent=1 // pred_fallthru
      _
    %323 = vsyncpa [#allocation3], 1
    %324 = vsyncpa [#allocation6], 1
    %325 = vsyncpa [#allocation4], 1

</llo_original>
